<compile_context>
chip_gen: v6e
topology: v6e:2x2x1
jax: 0.10.0
libtpu: 0.0.40
codegen_flags: <defaults>
</compile_context>

<pallas_src>
import functools
import math

import jax
import jax.numpy as jnp
from jax import lax
from jax.experimental import pallas as pl
from jax.experimental.pallas import tpu as pltpu


def _vmem_limit_bytes(blocks):
    """Explicit scoped-VMEM budget from (shape, dtype, n_buffers) block list.

    2x + 4 MiB headroom covers (8,128) tile padding and compiler-internal scratch;
    floor at the 16 MiB v5e default, cap below physical VMEM.  v7x users with very
    large D should additionally pass bf16 x/params (halves resident weights).
    """
    total = sum(math.prod(s) * jnp.dtype(d).itemsize * n for s, d, n in blocks)
    return int(min(100 << 20, max(16 << 20, 2 * total + (4 << 20))))


# --------------------------------------------------------------------------- #
# Kernel 1: fused QKV projection (runs once per token row, not per attention tile)
# --------------------------------------------------------------------------- #
def _qkv_proj_kernel(x_ref, w_ref, b_ref, qkv_ref):
    """Grid step (j, b, i): qkv[j, b, rows_i] = x[b, rows_i] @ W_j.T + b_j.

    x_ref:   (1, tm, D)   rows of x
    w_ref:   (1, D, D)    nn.Linear (out, in) weight for slab j (Q slab pre-scaled)
    b_ref:   (1, 1, D)    bias for slab j (Q slab pre-scaled)
    qkv_ref: (1, 1, tm, D) output slab
    """
    dn = (((1,), (1,)), ((), ()))   # contract embedding axis with the weight "in" axis
    acc = lax.dot_general(x_ref[0], w_ref[0], dn, preferred_element_type=jnp.float32)
    qkv_ref[0, 0] = (acc + b_ref[0]).astype(qkv_ref.dtype)


# --------------------------------------------------------------------------- #
# Kernel 2: flash attention over projected Q/K/V + fused output projection
# --------------------------------------------------------------------------- #
def _flash_attn_proj_kernel(q_ref, k_ref, v_ref, wp_ref, bp_ref, o_ref,
                            m_sc, l_sc, acc_sc, *, n_heads, head_size):
    """Grid step (b, qi, ki).

    q_ref:  (1, 1, tq, D)  projected, pre-scaled Q rows (re-DMA'd only when qi changes)
    k_ref:  (1, 1, tk, D)  projected K rows
    v_ref:  (1, 1, tk, D)  projected V rows
    wp_ref: (D, D)         output projection weight (out, in), single-buffered resident
    bp_ref: (1, D)         output projection bias
    o_ref:  (1, tq, D)     final output tile (lane-dense)
    m_sc:   (tq, H) f32    running max per head (lane h)
    l_sc:   (tq, H) f32    running denominator per head (lane h)
    acc_sc: (tq, D) f32    running numerator, head h in lanes [h*hs, (h+1)*hs)
    """
    kv_idx = pl.program_id(2)
    H, hs = n_heads, head_size
    dn = (((1,), (1,)), ((), ()))   # contract last axes: q·kT and y·WpT

    @pl.when(kv_idx == 0)
    def _init():
        m_sc[...] = jnp.full_like(m_sc, -jnp.inf)
        l_sc[...] = jnp.zeros_like(l_sc)
        acc_sc[...] = jnp.zeros_like(acc_sc)

    # Per-head online softmax.  Head slices are loaded from the refs inside the loop
    # so live ranges stay ~(tq+2*tk)*hs + tq*tk per iteration (no (tq, D) spills).
    # TODO(synk): for H >= ~16 switch this static unroll to lax.fori_loop(unroll=2..4)
    # with pl.ds lane slices to bound code size.
    for h in range(H):
        sl = slice(h * hs, (h + 1) * hs)
        qh = q_ref[0, 0, :, sl]                       # (tq, hs)
        kh = k_ref[0, 0, :, sl]                       # (tk, hs)
        vh = v_ref[0, 0, :, sl]                       # (tk, hs)

        s = lax.dot_general(qh, kh, dn, preferred_element_type=jnp.float32)  # (tq, tk)
        m_prev = m_sc[:, h:h + 1]                                            # (tq, 1)
        m_new = jnp.maximum(m_prev, jnp.max(s, axis=-1, keepdims=True))
        alpha = jnp.exp(m_prev - m_new)
        p = jnp.exp(s - m_new)                                               # (tq, tk)
        l_sc[:, h:h + 1] = alpha * l_sc[:, h:h + 1] + jnp.sum(p, axis=-1, keepdims=True)
        acc_sc[:, sl] = alpha * acc_sc[:, sl] + jnp.dot(
            p.astype(vh.dtype), vh, preferred_element_type=jnp.float32)
        m_sc[:, h:h + 1] = m_new

    # TODO(synk): attention / output dropout is identity at inference; no RNG mask here.

    @pl.when(kv_idx == pl.num_programs(2) - 1)
    def _finalize():
        # Normalize each head in place (acc is already lane-dense / "concatenated"),
        # then ONE full-depth (tq, D) x (D, D) output-projection matmul.
        inv_l = pl.reciprocal(l_sc[...], approx=True)            # (tq, H) on the EUP
        for h in range(H):
            sl = slice(h * hs, (h + 1) * hs)
            acc_sc[:, sl] = acc_sc[:, sl] * inv_l[:, h:h + 1]
        out = acc_sc[...].astype(wp_ref.dtype)                   # (tq, D)
        proj = lax.dot_general(out, wp_ref[...], dn, preferred_element_type=jnp.float32)
        o_ref[0] = (proj + bp_ref[...]).astype(o_ref.dtype)


# --------------------------------------------------------------------------- #
# Wrapper
# --------------------------------------------------------------------------- #
def multi_head_attention(x, params, *, q_tile=256, kv_tile=256, proj_tile=256):
    """x: (B, T, D).  params: dict of stacked per-head weights (see init_params).

    Defaults target v6e/v7x (256-deep MXU).  On v5e prefer q_tile=kv_tile=128.
    """
    B, T, D = x.shape
    wq, wk, wv = params["wq"], params["wk"], params["wv"]    # (H, hs, D) (out, in)
    bq, bk, bv = params["bq"], params["bk"], params["bv"]    # (H, 1, hs)
    wp, bp = params["wp"], params["bp"]                      # (D, D), (1, D)
    H, hs, _ = wq.shape
    assert H * hs == D

    dtype = x.dtype
    scale = hs ** -0.5
    # Fused (3, D, D) QKV weight in nn.Linear (out, in) layout; row h*hs+d of slab j
    # is head h's weight row d, so lane slice [h*hs:(h+1)*hs] of the projected
    # activation is head h's q/k/v.  1/sqrt(hs) folded into the Q slab (host-side,
    # param-sized op -> no per-step scale multiply in any kernel).
    wqkv = jnp.stack([wq.reshape(D, D) * scale,
                      wk.reshape(D, D),
                      wv.reshape(D, D)]).astype(dtype)
    bqkv = jnp.stack([bq.reshape(1, D) * scale,
                      bk.reshape(1, D),
                      bv.reshape(1, D)]).astype(dtype)
    wp = wp.astype(dtype)
    bp = bp.astype(dtype)

    tq = min(q_tile, T)
    tk = min(kv_tile, T)
    tm = min(proj_tile, T)
    assert T % tq == 0 and T % tk == 0 and T % tm == 0, \
        "sequence length must divide the tile sizes"

    # ---------------- pass 1: QKV projection (once per token) ---------------- #
    proj_vmem = _vmem_limit_bytes([
        ((1, tm, D), dtype, 2),      # x tile (double-buffered)
        ((1, D, D), dtype, 2),       # per-slab weight
        ((1, 1, D), dtype, 2),       # per-slab bias
        ((1, 1, tm, D), dtype, 2),   # output slab
    ])
    qkv = pl.pallas_call(
        _qkv_proj_kernel,
        out_shape=jax.ShapeDtypeStruct((3, B, T, D), dtype),
        grid_spec=pltpu.PrefetchScalarGridSpec(
            num_scalar_prefetch=0,
            grid=(3, B, T // tm),                 # j outermost: weight DMA'd 3x total
            in_specs=[
                pl.BlockSpec((1, tm, D), lambda j, b, i: (b, i, 0)),
                pl.BlockSpec((1, D, D), lambda j, b, i: (j, 0, 0)),
                pl.BlockSpec((1, 1, D), lambda j, b, i: (j, 0, 0)),
            ],
            out_specs=pl.BlockSpec((1, 1, tm, D), lambda j, b, i: (j, b, i, 0)),
        ),
        compiler_params=pltpu.CompilerParams(
            dimension_semantics=("arbitrary", "parallel", "parallel"),
            vmem_limit_bytes=proj_vmem),
        cost_estimate=pl.CostEstimate(
            flops=int(2 * 3 * B * T * D * D),
            transcendentals=0,
            bytes_accessed=int((x.size + wqkv.size + bqkv.size + 3 * B * T * D)
                               * dtype.itemsize)),
    )(x, wqkv, bqkv)

    # ---------------- pass 2: flash attention + fused output projection ------ #
    attn_vmem = _vmem_limit_bytes([
        ((1, 1, tq, D), dtype, 2),   # q tiles
        ((1, 1, tk, D), dtype, 2),   # k tiles
        ((1, 1, tk, D), dtype, 2),   # v tiles
        ((D, D), dtype, 1),          # wp (single-buffered)
        ((1, D), dtype, 1),          # bp (single-buffered)
        ((1, tq, D), dtype, 2),      # output tile
        ((tq, H), jnp.float32, 1),   # m
        ((tq, H), jnp.float32, 1),   # l
        ((tq, D), jnp.float32, 1),   # acc
    ])
    kernel = functools.partial(_flash_attn_proj_kernel, n_heads=H, head_size=hs)
    attn_flops = 4 * B * T * T * D + 2 * B * T * D * D
    attn_bytes = (3 * B * T * D + wp.size + bp.size + B * T * D) * dtype.itemsize

    out = pl.pallas_call(
        kernel,
        out_shape=jax.ShapeDtypeStruct((B, T, D), dtype),
        grid_spec=pltpu.PrefetchScalarGridSpec(
            num_scalar_prefetch=0,
            grid=(B, T // tq, T // tk),
            in_specs=[
                # qkv is passed three times; each spec reads a different leading slab.
                pl.BlockSpec((1, 1, tq, D), lambda b, qi, ki: (0, b, qi, 0)),
                # NOTE: if the kv stream becomes DMA-exposed after the projection
                # hoist, bump these two to pipeline_mode=pl.Buffered(3).
                pl.BlockSpec((1, 1, tk, D), lambda b, qi, ki: (1, b, ki, 0)),
                pl.BlockSpec((1, 1, tk, D), lambda b, qi, ki: (2, b, ki, 0)),
                # Grid-invariant weights: single-buffered residents (no double DMA /
                # no doubled VMEM footprint).
                pl.BlockSpec((D, D), lambda b, qi, ki: (0, 0),
                             pipeline_mode=pl.Buffered(1)),
                pl.BlockSpec((1, D), lambda b, qi, ki: (0, 0),
                             pipeline_mode=pl.Buffered(1)),
            ],
            out_specs=pl.BlockSpec((1, tq, D), lambda b, qi, ki: (b, qi, 0)),
            scratch_shapes=[
                pltpu.VMEM((tq, H), jnp.float32),    # m (lane-dense)
                pltpu.VMEM((tq, H), jnp.float32),    # l (lane-dense)
                pltpu.VMEM((tq, D), jnp.float32),    # acc (lane-dense)
            ],
        ),
        compiler_params=pltpu.CompilerParams(
            dimension_semantics=("parallel", "parallel", "arbitrary"),
            vmem_limit_bytes=attn_vmem),
        cost_estimate=pl.CostEstimate(
            flops=int(attn_flops),
            transcendentals=int(B * H * T * T),
            bytes_accessed=int(attn_bytes)),
    )(qkv, qkv, qkv, wp, bp)

    return out


# --------------------------------------------------------------------------- #
# Params / reference / test
# --------------------------------------------------------------------------- #
def init_params(key, n_embd, n_heads):
    head_size = n_embd // n_heads
    ks = jax.random.split(key, 8)
    # Mimic nn.Linear default init: U(-1/sqrt(fan_in), 1/sqrt(fan_in))
    bound = 1.0 / (n_embd ** 0.5)
    wq = jax.random.uniform(ks[0], (n_heads, head_size, n_embd), jnp.float32, -bound, bound)
    wk = jax.random.uniform(ks[1], (n_heads, head_size, n_embd), jnp.float32, -bound, bound)
    wv = jax.random.uniform(ks[2], (n_heads, head_size, n_embd), jnp.float32, -bound, bound)
    bq = jax.random.uniform(ks[3], (n_heads, 1, head_size), jnp.float32, -bound, bound)
    bk = jax.random.uniform(ks[4], (n_heads, 1, head_size), jnp.float32, -bound, bound)
    bv = jax.random.uniform(ks[5], (n_heads, 1, head_size), jnp.float32, -bound, bound)
    wp = jax.random.uniform(ks[6], (n_embd, n_embd), jnp.float32, -bound, bound)
    bp = jax.random.uniform(ks[7], (1, n_embd), jnp.float32, -bound, bound)
    return dict(wq=wq, wk=wk, wv=wv, bq=bq, bk=bk, bv=bv, wp=wp, bp=bp)


def reference_mha(x, params):
    """Pure-JAX reference matching the PyTorch forward (eval mode)."""
    B, T, D = x.shape
    H, hs, _ = params["wq"].shape
    outs = []
    for h in range(H):
        q = x @ params["wq"][h].T + params["bq"][h, 0]
        k = x @ params["wk"][h].T + params["bk"][h, 0]
        v = x @ params["wv"][h].T + params["bv"][h, 0]
        att = (q @ jnp.swapaxes(k, 1, 2)) * (hs ** -0.5)
        att = jax.nn.softmax(att, axis=-1)
        outs.append(att @ v)
    y = jnp.concatenate(outs, axis=-1)
    return y @ params["wp"].T + params["bp"][0]


if __name__ == "__main__":
    B, T, D, H = 2, 8, 32, 4
    key = jax.random.PRNGKey(0)
    kx, kp = jax.random.split(key)
    x = jax.random.normal(kx, (B, T, D), jnp.float32)
    params = init_params(kp, D, H)

    out = multi_head_attention(x, params)
    out = jax.block_until_ready(out)

    ref = reference_mha(x, params)
    assert out.shape == (B, T, D)
    # Tolerance accommodates the EUP approximate reciprocal used for the softmax denom.
    assert jnp.allclose(out, ref, atol=5e-3, rtol=5e-3), \
        f"max err {jnp.max(jnp.abs(out - ref))}"
    print("KERNEL_OK")
</pallas_src>

<mosaic_0001>
module attributes {stable_mosaic.version = 11 : i64} {
  func.func @_qkv_proj_kernel(%arg0: i32, %arg1: i32, %arg2: i32, %arg3: memref<1x8x32xf32, #tpu.memory_space<vmem>>, %arg4: memref<1x32x32xf32, #tpu.memory_space<vmem>>, %arg5: memref<1x1x32xf32, #tpu.memory_space<vmem>>, %arg6: memref<1x1x8x32xf32, #tpu.memory_space<vmem>>) attributes {dimension_semantics = [#tpu.dimension_semantics<arbitrary>, #tpu.dimension_semantics<parallel>, #tpu.dimension_semantics<parallel>], iteration_bounds = array<i64: 3, 2, 1>, scalar_prefetch = 0 : i64, scratch_operands = 0 : i64, tpu.core_type = #tpu.core_type<tc>, window_params = [{transform_indices = @transform_0, window_bounds = array<i64: 1, 8, 32>}, {transform_indices = @transform_1, window_bounds = array<i64: 1, 32, 32>}, {transform_indices = @transform_2, window_bounds = array<i64: 1, 1, 32>}, {transform_indices = @transform_3, window_bounds = array<i64: 1, 1, 8, 32>}]} {
    %c0 = arith.constant 0 : index
    %c0_0 = arith.constant 0 : index
    %c0_1 = arith.constant 0 : index
    %0 = vector.load %arg3[%c0, %c0_0, %c0_1] : memref<1x8x32xf32, #tpu.memory_space<vmem>>, vector<1x8x32xf32>
    %1 = vector.shape_cast %0 : vector<1x8x32xf32> to vector<8x32xf32>
    %c0_2 = arith.constant 0 : index
    %c0_3 = arith.constant 0 : index
    %c0_4 = arith.constant 0 : index
    %2 = vector.load %arg4[%c0_2, %c0_3, %c0_4] : memref<1x32x32xf32, #tpu.memory_space<vmem>>, vector<1x32x32xf32>
    %3 = vector.shape_cast %2 : vector<1x32x32xf32> to vector<32x32xf32>
    %cst = arith.constant dense<0.000000e+00> : vector<8x32xf32>
    %4 = tpu.matmul %1, %3, %cst {dimension_numbers = #tpu.dot_dimension_numbers<[1], [1], [0], [0], [0, 0, 1, 0], [], []>} : vector<8x32xf32>, vector<32x32xf32>, vector<8x32xf32> -> vector<8x32xf32>
    %c0_5 = arith.constant 0 : index
    %c0_6 = arith.constant 0 : index
    %c0_7 = arith.constant 0 : index
    %5 = vector.load %arg5[%c0_5, %c0_6, %c0_7] : memref<1x1x32xf32, #tpu.memory_space<vmem>>, vector<1x1x32xf32>
    %6 = vector.shape_cast %5 : vector<1x1x32xf32> to vector<1x32xf32>
    %7 = vector.broadcast %6 : vector<1x32xf32> to vector<8x32xf32>
    %8 = arith.addf %4, %7 : vector<8x32xf32>
    %c0_8 = arith.constant 0 : index
    %c0_9 = arith.constant 0 : index
    %c0_10 = arith.constant 0 : index
    %c0_11 = arith.constant 0 : index
    %9 = vector.load %arg6[%c0_8, %c0_9, %c0_10, %c0_11] : memref<1x1x8x32xf32, #tpu.memory_space<vmem>>, vector<1x1x8x32xf32>
    %10 = vector.shape_cast %9 : vector<1x1x8x32xf32> to vector<8x32xf32>
    %11 = vector.shape_cast %8 : vector<8x32xf32> to vector<1x1x8x32xf32>
    tpu.vector_store %arg6[%c0_8, %c0_9, %c0_10, %c0_11], %11 {strides = array<i32>} : memref<1x1x8x32xf32, #tpu.memory_space<vmem>>, vector<1x1x8x32xf32>,
    return
  }
  func.func @transform_0(%arg0: i32, %arg1: i32, %arg2: i32) -> (i32, i32, i32) {
    %c0_i32 = arith.constant 0 : i32
    %c0_i32_0 = arith.constant 0 : i32
    return %arg1, %arg2, %c0_i32 : i32, i32, i32
  }
  func.func @transform_1(%arg0: i32, %arg1: i32, %arg2: i32) -> (i32, i32, i32) {
    %c0_i32 = arith.constant 0 : i32
    %c0_i32_0 = arith.constant 0 : i32
    %c0_i32_1 = arith.constant 0 : i32
    return %arg0, %c0_i32, %c0_i32_0 : i32, i32, i32
  }
  func.func @transform_2(%arg0: i32, %arg1: i32, %arg2: i32) -> (i32, i32, i32) {
    %c0_i32 = arith.constant 0 : i32
    %c0_i32_0 = arith.constant 0 : i32
    %c0_i32_1 = arith.constant 0 : i32
    return %arg0, %c0_i32, %c0_i32_0 : i32, i32, i32
  }
  func.func @transform_3(%arg0: i32, %arg1: i32, %arg2: i32) -> (i32, i32, i32, i32) {
    %c0_i32 = arith.constant 0 : i32
    %c0_i32_0 = arith.constant 0 : i32
    return %arg0, %arg1, %arg2, %c0_i32 : i32, i32, i32, i32
  }
}

</mosaic_0001>

<llo_original>
// kernel: tpu_custom_call.1
$region0: #{tpu_custom_call.1}
  #allocation0 [shape = 'u32[]', space=smem, size = 0x4, offset = 0x4, fixed_abs, tag = 'smem constant byte address 0x4 - core index']
  #allocation1 [shape = 'u32[144,128]{1,0:T(1,128)}', space=vmem, size = 0x12000, scoped, tag = 'internal scratch']
  %s0 = inlined_call_operand.hbm [shape: f32[2,8,32], index: 0, kind: input, shape index: {}]
  %s1 = inlined_call_operand.hbm [shape: f32[3,32,32], index: 1, kind: input, shape index: {}]
  %s2 = inlined_call_operand.vmem [shape: f32[3,1,32], index: 2, kind: input, shape index: {}]
  %s3 = inlined_call_operand.hbm [shape: f32[3,2,8,32], index: 3, kind: output, shape index: {}]
  %s4 = sld [smem:[#allocation0]]
  $region53: #{tpu_custom_call.1} parent=0
    _
  %s6 = ssub.s32 1, %s4
  %s7 = scalar_select 0, %s6, %s4
  $region1: #{tpu_custom_call.1} parent=0
    #allocation2 [shape = 'u8[8192]{0}', space=vmem, size = 0x2000, scoped, tag = 'input window, operand 0']
    #allocation3 [shape = 's32[2]{0}', space=sflag, size = 0x8, scoped, tag = 'scoped memory for tpu_custom_call.1']
    #allocation4 [shape = 's32[2]{0}', space=sflag, size = 0x8, scoped, tag = 'scoped memory for tpu_custom_call.1']
    #allocation5 [shape = 'u8[32768]{0}', space=vmem, size = 0x8000, scoped, tag = 'input window, operand 1']
    #allocation6 [shape = 's32[2]{0}', space=sflag, size = 0x8, scoped, tag = 'scoped memory for tpu_custom_call.1']
    #allocation7 [shape = 'u8[8192]{0}', space=vmem, size = 0x2000, scoped, tag = 'output window, operand 0']
    %8 = vsyncpa [#allocation3], 0
    %s9 = scalar_lea.sflag [#allocation3], 1
    %10 = vsyncpa %s9, 0
    %11 = vsyncpa [#allocation6], 0
    %s12 = scalar_lea.sflag [#allocation6], 1
    %13 = vsyncpa %s12, 0
    %14 = vsyncpa [#allocation4], 0
    %s15 = scalar_lea.sflag [#allocation4], 1
    %16 = vsyncpa %s15, 0
    loop: start=0, step=1, limit=8
    $region2: #{tpu_custom_call.1} parent=1 // loop_pre_header
      _
    $region3: #{tpu_custom_call.1} parent=1 // loop_header
      %s18 = sphi 0, %s22
      %p19 = scmp.ge.s32.totalorder %s18, 8
      %s25 = sphi 0, %s44
      %s26 = sphi 0, %s40
      %s27 = sphi 0, %s36
      %s28 = sphi 0, %s25
      %s29 = sphi 0, %s26
      %s30 = sphi 0, %s27
      %s31 = sphi 0, %s28
      %s32 = sphi 0, %s29
      %s33 = sphi 0, %s30
      %s49 = sphi 0, %s51
      %s52 = sphi 0, %s49
      %s53 = sphi 0, %s52
      %s69 = sphi 0, %s53
      %s75 = sphi 0, %s77
      %s78 = sphi 0, %s75
      %s79 = sphi 0, %s78
      %s95 = sphi 0, %s79
      %s101 = sphi 0, %s103
      %s104 = sphi 0, %s101
      %s105 = sphi 0, %s104
      %s121 = sphi 0, %s105
      %s131 = sphi 0, %s133
      %s134 = sphi 0, %s131
      %s135 = sphi 0, %s134
      %s151 = sphi 0, %s135
    $region4: #{tpu_custom_call.1} parent=1 // loop_header_branch
      %21 = sbr.rel (%p19) target = $region8
    $region5: #{tpu_custom_call.1} parent=1 // loop_body
      %s23 = ssub.s32 %s18, 1
      %s24 = ssub.s32 %s18, 2
      %s34 = sadd.s32 1, %s27
      %p35 = scmp.ge.s32.totalorder %s34, 1
      %s36 = scalar_select %p35, 0, %s34
      %s37 = sadd.s32 1, %s26
      %s38 = scalar_select %p35, %s37, %s26
      %p39 = scmp.ge.s32.totalorder %s38, 2
      %s40 = scalar_select %p39, 0, %s38
      %s41 = sadd.s32 1, %s25
      %s42 = scalar_select %p39, %s41, %s25
      %p43 = scmp.ge.s32.totalorder %s42, 3
      %s44 = scalar_select %p43, 0, %s42
      %s45 = ssub.s32 %s26, %s40
      %s46 = ssub.s32 %s27, %s36
      %s47 = sor.u32 %s45, %s46
      %p48 = scmp.eq.s32.totalorder %s47, 0
      %s50 = sadd.s32 %s49, 1
      %s51 = scalar_select %p48, %s49, %s50
      %p54 = pneg %p48
      %p55 = scmp.eq.s32.totalorder %s18, 5
      %p56 = por %p54, %p55
      %p57 = scmp.ne.s32.totalorder %s49, %s52
      %p58 = scmp.eq.s32.totalorder %s18, 0
      %p59 = por %p57, %p58
      %p60 = scmp.ne.s32.totalorder %s49, %s52
      %p61 = scmp.eq.s32.totalorder %s23, 5
      %p62 = por %p60, %p61
      %p63 = scmp.ne.s32.totalorder %s52, %s53
      %p64 = scmp.eq.s32.totalorder %s23, 0
      %p65 = por %p63, %p64
      %p66 = scmp.ne.s32.totalorder %s52, %s53
      %p67 = scmp.eq.s32.totalorder %s24, 5
      %p68 = por %p66, %p67
      %p70 = scmp.ne.s32.totalorder %s53, %s69
      %p71 = scmp.eq.s32.totalorder %s24, 0
      %p72 = por %p70, %p71
      %s73 = ssub.s32 %s25, %s44
      %p74 = scmp.eq.s32.totalorder %s73, 0
      %s76 = sadd.s32 %s75, 1
      %s77 = scalar_select %p74, %s75, %s76
      %p80 = pneg %p74
      %p81 = scmp.eq.s32.totalorder %s18, 5
      %p82 = por %p80, %p81
      %p83 = scmp.ne.s32.totalorder %s75, %s78
      %p84 = scmp.eq.s32.totalorder %s18, 0
      %p85 = por %p83, %p84
      %p86 = scmp.ne.s32.totalorder %s75, %s78
      %p87 = scmp.eq.s32.totalorder %s23, 5
      %p88 = por %p86, %p87
      %p89 = scmp.ne.s32.totalorder %s78, %s79
      %p90 = scmp.eq.s32.totalorder %s23, 0
      %p91 = por %p89, %p90
      %p92 = scmp.ne.s32.totalorder %s78, %s79
      %p93 = scmp.eq.s32.totalorder %s24, 5
      %p94 = por %p92, %p93
      %p96 = scmp.ne.s32.totalorder %s79, %s95
      %p97 = scmp.eq.s32.totalorder %s24, 0
      %p98 = por %p96, %p97
      %s99 = ssub.s32 %s25, %s44
      %p100 = scmp.eq.s32.totalorder %s99, 0
      %s102 = sadd.s32 %s101, 1
      %s103 = scalar_select %p100, %s101, %s102
      %p106 = pneg %p100
      %p107 = scmp.eq.s32.totalorder %s18, 5
      %p108 = por %p106, %p107
      %p109 = scmp.ne.s32.totalorder %s101, %s104
      %p110 = scmp.eq.s32.totalorder %s18, 0
      %p111 = por %p109, %p110
      %p112 = scmp.ne.s32.totalorder %s101, %s104
      %p113 = scmp.eq.s32.totalorder %s23, 5
      %p114 = por %p112, %p113
      %p115 = scmp.ne.s32.totalorder %s104, %s105
      %p116 = scmp.eq.s32.totalorder %s23, 0
      %p117 = por %p115, %p116
      %p118 = scmp.ne.s32.totalorder %s104, %s105
      %p119 = scmp.eq.s32.totalorder %s24, 5
      %p120 = por %p118, %p119
      %p122 = scmp.ne.s32.totalorder %s105, %s121
      %p123 = scmp.eq.s32.totalorder %s24, 0
      %p124 = por %p122, %p123
      %s125 = ssub.s32 %s25, %s44
      %s126 = ssub.s32 %s26, %s40
      %s127 = sor.u32 %s125, %s126
      %s128 = ssub.s32 %s27, %s36
      %s129 = sor.u32 %s127, %s128
      %p130 = scmp.eq.s32.totalorder %s129, 0
      %s132 = sadd.s32 %s131, 1
      %s133 = scalar_select %p130, %s131, %s132
      %p136 = pneg %p130
      %p137 = scmp.eq.s32.totalorder %s18, 5
      %p138 = por %p136, %p137
      %p139 = scmp.ne.s32.totalorder %s131, %s134
      %p140 = scmp.eq.s32.totalorder %s18, 0
      %p141 = por %p139, %p140
      %p142 = scmp.ne.s32.totalorder %s131, %s134
      %p143 = scmp.eq.s32.totalorder %s23, 5
      %p144 = por %p142, %p143
      %p145 = scmp.ne.s32.totalorder %s134, %s135
      %p146 = scmp.eq.s32.totalorder %s23, 0
      %p147 = por %p145, %p146
      %p148 = scmp.ne.s32.totalorder %s134, %s135
      %p149 = scmp.eq.s32.totalorder %s24, 5
      %p150 = por %p148, %p149
      %p152 = scmp.ne.s32.totalorder %s135, %s151
      %p153 = scmp.eq.s32.totalorder %s24, 0
      %p154 = por %p152, %p153
      %p155 = scmp.le.s32.totalorder 1, %s18
      %p156 = scmp.lt.s32.totalorder %s18, 7
      %p157 = pnand %p155, %p156
      %p158 = pneg %p157
      // Predicated region
      $region9: #{tpu_custom_call.1} parent=5 // pred_check
        _
      $region10: #{tpu_custom_call.1} parent=5 // pred_check_branch
        %160 = sbr.rel (%p157) target = $region12
      $region11: #{tpu_custom_call.1} parent=5 // pred_region
        %s161 = ssub.s32 %s18, 1
      $region12: #{tpu_custom_call.1} parent=5 // pred_fallthru
        _
      %p162 = scmp.lt.s32.totalorder %s18, 6
      // Predicated region
      $region13: #{tpu_custom_call.1} parent=5 // pred_check
        %p163 = pneg %p162
      $region14: #{tpu_custom_call.1} parent=5 // pred_check_branch
        %165 = sbr.rel (%p163) target = $region16
      $region15: #{tpu_custom_call.1} parent=5 // pred_region
        // Predicated region
        $region17: #{tpu_custom_call.1} parent=15 // pred_check
          %p166 = pneg %p59
        $region18: #{tpu_custom_call.1} parent=15 // pred_check_branch
          %168 = sbr.rel (%p166) target = $region20
        $region19: #{tpu_custom_call.1} parent=15 // pred_region
          %s169 = sand.u32 %s49, 1
          %s170 = scalar_lea.sflag [#allocation3], %s169
          %s171 = sand.u32 %s49, 1
          %s172 = smul.addr %s171, 8
          %s173 = scalar_lea.vmem [#allocation2], %s172
          %s175 = ssub.s32 128, 128
          %176 = vsyncadd %s170, %s175
          %s177 = sadd.s32 %s27, %s26
          %s178 = smul.addr %s177, 128
          %s179 = scalar_lea.hbm %s0, %s178
          %s181 = sshll.u32 %s173, 4
          %s182 = int_to_ptr.vmem [resolvable:$true] %s181
          %184 = dma.hbm_to_vmem [thread:$0]  %s179, 128, %s182, %s170
        $region20: #{tpu_custom_call.1} parent=15 // pred_fallthru
          _
        // Predicated region
        $region21: #{tpu_custom_call.1} parent=15 // pred_check
          %p185 = pneg %p85
        $region22: #{tpu_custom_call.1} parent=15 // pred_check_branch
          %187 = sbr.rel (%p185) target = $region24
        $region23: #{tpu_custom_call.1} parent=15 // pred_region
          %s188 = sand.u32 %s75, 1
          %s189 = scalar_lea.sflag [#allocation6], %s188
          %s190 = sand.u32 %s75, 1
          %s191 = smul.addr %s190, 32
          %s192 = scalar_lea.vmem [#allocation5], %s191
          %s194 = ssub.s32 512, 512
          %195 = vsyncadd %s189, %s194
          %s196 = smul.addr %s25, 4
          %s197 = smul.addr %s196, 128
          %s198 = scalar_lea.hbm %s1, %s197
          %s199 = sshll.u32 %s192, 4
          %s200 = int_to_ptr.vmem [resolvable:$true] %s199
          %205 = dma.hbm_to_vmem [thread:$0]  %s198, 512, %s200, %s189, 128, 128, 8
        $region24: #{tpu_custom_call.1} parent=15 // pred_fallthru
          _
        // Predicated region
        $region25: #{tpu_custom_call.1} parent=15 // pred_check
          %p206 = pneg %p111
        $region26: #{tpu_custom_call.1} parent=15 // pred_check_branch
          %208 = sbr.rel (%p206) target = $region28
        $region27: #{tpu_custom_call.1} parent=15 // pred_region
          %p209 = scmp.lt.s32.totalorder %s25, 2
          %s210 = scalar_select %p209, %s25, 2
          %s211 = scalar_lea.vmem %s2, %s210
        $region28: #{tpu_custom_call.1} parent=15 // pred_fallthru
          _
      $region16: #{tpu_custom_call.1} parent=5 // pred_fallthru
        _
      %p212 = scmp.le.s32.totalorder 1, %s18
      %p213 = scmp.lt.s32.totalorder %s18, 7
      %p214 = pnand %p212, %p213
      %p215 = pneg %p214
      // Predicated region
      $region29: #{tpu_custom_call.1} parent=5 // pred_check
        _
      $region30: #{tpu_custom_call.1} parent=5 // pred_check_branch
        %217 = sbr.rel (%p214) target = $region32
      $region31: #{tpu_custom_call.1} parent=5 // pred_region
        %s218 = ssub.s32 %s18, 1
        %s219 = sand.u32 %s52, 1
        %s220 = scalar_lea.sflag [#allocation3], %s219
        %s221 = sand.u32 %s52, 1
        %s222 = smul.addr %s221, 8
        %s223 = scalar_lea.vmem [#allocation2], %s222
        // Predicated region
        $region33: #{tpu_custom_call.1} parent=31 // pred_check
          %p224 = pneg %p65
        $region34: #{tpu_custom_call.1} parent=31 // pred_check_branch
          %226 = sbr.rel (%p224) target = $region36
        $region35: #{tpu_custom_call.1} parent=31 // pred_region
          %227 = dma.done %s220, 128
        $region36: #{tpu_custom_call.1} parent=31 // pred_fallthru
          _
        %s228 = sand.u32 %s78, 1
        %s229 = scalar_lea.sflag [#allocation6], %s228
        %s230 = sand.u32 %s78, 1
        %s231 = smul.addr %s230, 32
        %s232 = scalar_lea.vmem [#allocation5], %s231
        // Predicated region
        $region37: #{tpu_custom_call.1} parent=31 // pred_check
          %p233 = pneg %p91
        $region38: #{tpu_custom_call.1} parent=31 // pred_check_branch
          %235 = sbr.rel (%p233) target = $region40
        $region39: #{tpu_custom_call.1} parent=31 // pred_region
          %236 = dma.done %s229, 512
        $region40: #{tpu_custom_call.1} parent=31 // pred_fallthru
          _
        %s237 = sand.u32 %s52, 1
        %s238 = scalar_lea.sflag [#allocation3], %s237
        %s239 = sand.u32 %s52, 1
        %s240 = smul.addr %s239, 8
        %s241 = scalar_lea.vmem [#allocation2], %s240
        %p242 = pneg %p65
        %p243 = pneg %p62
        %s244 = sand.u32 %s78, 1
        %s245 = scalar_lea.sflag [#allocation6], %s244
        %s246 = sand.u32 %s78, 1
        %s247 = smul.addr %s246, 32
        %s248 = scalar_lea.vmem [#allocation5], %s247
        %p249 = pneg %p91
        %p250 = pneg %p88
        %p251 = scmp.lt.s32.totalorder %s28, 2
        %s252 = scalar_select %p251, %s28, 2
        %s253 = scalar_lea.vmem %s2, %s252
        %p254 = pneg %p117
        %p255 = pneg %p114
        %p256 = pneg %p147
        %p257 = pneg %p144
        %s258 = sand.u32 %s134, 1
        %s259 = scalar_lea.sflag [#allocation4], %s258
        %s260 = sand.u32 %s134, 1
        %s261 = smul.addr %s260, 8
        %s262 = scalar_lea.vmem [#allocation7], %s261
        %p263 = scmp.lt.s32.totalorder %s28, 2
        %s264 = scalar_select %p263, %s28, 2
        %s265 = scalar_lea.vmem %s2, %s264
        %v266 = vld [vmem:[%s223] sm:$0xff]
        %v267 = vld [vmem:[%s232] sm:$0xff]
        %v268 = vld [vmem:[%s232 + $0x8] sm:$0xff]
        %v269 = vld [vmem:[%s232 + $0x10] sm:$0xff]
        %v270 = vld [vmem:[%s232 + $0x18] sm:$0xff]
        %v271 = vld [vmem:[%s265] sm:$0x1]
        %v273 = vlaneseq
        %v274 = vshrl.u32 %v273, 7
        %v275 = vsub.s32 0, %v274
        %v276 = vrot.slane %v271, %v275
        %vm278 = vcmask 261120
        %v280 = vsel %vm278, %v266, 0
        %v283 = vsel %vm278, %v267, 0
        %v286 = vsel %vm278, %v268, 0
        %v289 = vsel %vm278, %v269, 0
        %v292 = vsel %vm278, %v270, 0
        %294 = vmatprep.subr.mxu0 0.0
        %295 = vmatpush1.xpose.msra.mxu0 0.0
        %296 = vmatprep.subr.mxu0 0.0
        %297 = vmatpush1.xpose.msra.mxu0 0.0
        %298 = vmatprep.subr.mxu0 0.0
        %299 = vmatpush1.xpose.msra.mxu0 0.0
        %300 = vmatprep.subr.mxu0 0.0
        %301 = vmatpush1.xpose.msra.mxu0 0.0
        %302 = vmatprep.subr.mxu0 0.0
        %303 = vmatpush1.xpose.msra.mxu0 0.0
        %304 = vmatprep.subr.mxu0 0.0
        %305 = vmatpush1.xpose.msra.mxu0 0.0
        %306 = vmatprep.subr.mxu0 0.0
        %307 = vmatpush1.xpose.msra.mxu0 0.0
        %308 = vmatprep.subr.mxu0 0.0
        %309 = vmatpush1.xpose.msra.mxu0 0.0
        %310 = vmatprep.subr.mxu0 0.0
        %311 = vmatpush1.xpose.msra.mxu0 0.0
        %312 = vmatprep.subr.mxu0 0.0
        %313 = vmatpush1.xpose.msra.mxu0 0.0
        %314 = vmatprep.subr.mxu0 0.0
        %315 = vmatpush1.xpose.msra.mxu0 0.0
        %316 = vmatprep.subr.mxu0 0.0
        %317 = vmatpush1.xpose.msra.mxu0 0.0
        %318 = vmatprep.subr.mxu0 0.0
        %319 = vmatpush1.xpose.msra.mxu0 %v292
        %320 = vmatprep.subr.mxu0 0.0
        %321 = vmatpush1.xpose.msra.mxu0 %v289
        %322 = vmatprep.subr.mxu0 0.0
        %323 = vmatpush1.xpose.msra.mxu0 %v286
        %324 = vmatprep.subr.mxu0 0.0
        %325 = vmatpush1.xpose.msra.mxu0 %v283
        %326 = vmatprep.subr.mxu0 0.0
        %327 = vmatpush2.xpose.msra.mxu0 0.0
        %328 = vmatprep.subr.mxu0 0.0
        %329 = vmatpush2.xpose.msra.mxu0 0.0
        %330 = vmatprep.subr.mxu0 0.0
        %331 = vmatpush2.xpose.msra.mxu0 0.0
        %332 = vmatprep.subr.mxu0 0.0
        %333 = vmatpush2.xpose.msra.mxu0 0.0
        %334 = vmatprep.subr.mxu0 0.0
        %335 = vmatpush2.xpose.msra.mxu0 0.0
        %336 = vmatprep.subr.mxu0 0.0
        %337 = vmatpush2.xpose.msra.mxu0 0.0
        %338 = vmatprep.subr.mxu0 0.0
        %339 = vmatpush2.xpose.msra.mxu0 0.0
        %340 = vmatprep.subr.mxu0 0.0
        %341 = vmatpush2.xpose.msra.mxu0 0.0
        %342 = vmatprep.subr.mxu0 0.0
        %343 = vmatpush2.xpose.msra.mxu0 0.0
        %344 = vmatprep.subr.mxu0 0.0
        %345 = vmatpush2.xpose.msra.mxu0 0.0
        %346 = vmatprep.subr.mxu0 0.0
        %347 = vmatpush2.xpose.msra.mxu0 0.0
        %348 = vmatprep.subr.mxu0 0.0
        %349 = vmatpush2.xpose.msra.mxu0 0.0
        %350 = vmatprep.subr.mxu0 0.0
        %351 = vmatpush2.xpose.msra.mxu0 0.0
        %352 = vmatprep.subr.mxu0 0.0
        %353 = vmatpush2.xpose.msra.mxu0 0.0
        %354 = vmatprep.subr.mxu0 0.0
        %355 = vmatpush2.xpose.msra.mxu0 0.0
        %356 = vmatprep.subr.mxu0 0.0
        %357 = vmatpush2.xpose.msra.mxu0 0.0
        %358 = vmatprep.mubr.f32.mxu0 0.0
        %359 = vmatmul.mubr.f32.gmra.mxu0 %v280
        %v360 = vpop.f32.mrf.mxu0
        %v361 = vadd.f32 %v276, %v360
        %v362 = vpop.f32.mrf.mxu0
        %363 = vdwg.mxu0
        %364 = vst.msk [vmem:[%s262] sm:$0xff] %vm278, %v361
        %s365 = sand.u32 %s134, 1
        %s366 = scalar_lea.sflag [#allocation4], %s365
        %s367 = sand.u32 %s134, 1
        %s368 = smul.addr %s367, 8
        %s369 = scalar_lea.vmem [#allocation7], %s368
        // Predicated region
        $region41: #{tpu_custom_call.1} parent=31 // pred_check
          %p370 = pneg %p144
        $region42: #{tpu_custom_call.1} parent=31 // pred_check_branch
          %372 = sbr.rel (%p370) target = $region44
        $region43: #{tpu_custom_call.1} parent=31 // pred_region
          %s374 = ssub.s32 128, 128
          %375 = vsyncadd %s366, %s374
          %s376 = sadd.s32 %s30, %s29
          %s377 = smul.addr %s28, 2
          %s378 = sadd.s32 %s376, %s377
          %s379 = smul.addr %s378, 128
          %s380 = scalar_lea.hbm %s3, %s379
          %s382 = sshll.u32 %s369, 4
          %s383 = int_to_ptr.vmem [resolvable:$true] %s382
          %385 = dma.vmem_to_hbm [thread:$0]  %s383, 128, %s380, %s366
        $region44: #{tpu_custom_call.1} parent=31 // pred_fallthru
          _
      $region32: #{tpu_custom_call.1} parent=5 // pred_fallthru
        _
      %p386 = scmp.le.s32.totalorder 2, %s18
      // Predicated region
      $region45: #{tpu_custom_call.1} parent=5 // pred_check
        %p387 = pneg %p386
      $region46: #{tpu_custom_call.1} parent=5 // pred_check_branch
        %389 = sbr.rel (%p387) target = $region48
      $region47: #{tpu_custom_call.1} parent=5 // pred_region
        %s390 = ssub.s32 %s18, 2
        // Predicated region
        $region49: #{tpu_custom_call.1} parent=47 // pred_check
          %p391 = pneg %p150
        $region50: #{tpu_custom_call.1} parent=47 // pred_check_branch
          %393 = sbr.rel (%p391) target = $region52
        $region51: #{tpu_custom_call.1} parent=47 // pred_region
          %s394 = sand.u32 %s135, 1
          %s395 = scalar_lea.sflag [#allocation4], %s394
          %s396 = sand.u32 %s135, 1
          %s397 = smul.addr %s396, 8
          %s398 = scalar_lea.vmem [#allocation7], %s397
          %399 = dma.done %s395, 128
        $region52: #{tpu_custom_call.1} parent=47 // pred_fallthru
          _
      $region48: #{tpu_custom_call.1} parent=5 // pred_fallthru
        _
    $region6: #{tpu_custom_call.1} parent=1 // loop_footer
      %s22 = sadd.s32 1, %s18
    $region7: #{tpu_custom_call.1} parent=1 // loop_footer_branch
      %17 = sbr.rel target = $region3
    $region8: #{tpu_custom_call.1} parent=1 // loop_exit
      _
    %400 = vsyncpa [#allocation3], 1
    %s401 = scalar_lea.sflag [#allocation3], 1
    %402 = vsyncpa %s401, 1
    %403 = vsyncpa [#allocation6], 1
    %s404 = scalar_lea.sflag [#allocation6], 1
    %405 = vsyncpa %s404, 1
    %406 = vsyncpa [#allocation4], 1
    %s407 = scalar_lea.sflag [#allocation4], 1
    %408 = vsyncpa %s407, 1

</llo_original>
